<compile_context>
chip_gen: v6e
topology: v6e:2x2x1
jax: 0.10.0
libtpu: 0.0.40
codegen_flags: <defaults>
</compile_context>

<pallas_src>
import functools

import jax
import jax.numpy as jnp
from jax.experimental import pallas as pl
from jax.experimental.pallas import tpu as pltpu

HEAD_PAD = 128  # lane-dense packed head width (policy cols | value col | zero pad)


def a2c_forward_kernel(x_ref, w1_ref, b1_ref, w2_ref, b2_ref,
                       wh_ref, bh_ref, out_ref, *, action_dim):
    """Fused MLP features + packed (softmax policy | value | pad) heads for one batch tile."""
    x = x_ref[...]                                              # [TB, obs] bf16

    # feature_extractor: Linear -> ReLU -> (Dropout=identity) -> Linear -> ReLU
    h1 = jnp.dot(x, w1_ref[...], preferred_element_type=jnp.float32)
    h1 = jnp.maximum(h1 + b1_ref[...], 0.0)                     # [TB, H] f32
    h1 = h1.astype(w2_ref.dtype)                                # bf16 for MXU
    h2 = jnp.dot(h1, w2_ref[...], preferred_element_type=jnp.float32)
    feats = jnp.maximum(h2 + b2_ref[...], 0.0)                  # [TB, H] f32
    feats = feats.astype(wh_ref.dtype)                          # bf16 for MXU

    # fused heads: [TB, 128] = feats @ [wp | wv | 0] + [0...0, bv, 0...0]
    heads = jnp.dot(feats, wh_ref[...],
                    preferred_element_type=jnp.float32) + bh_ref[...]

    # masked softmax over the first `action_dim` columns; value column (col==A)
    # passes through; zero-padded columns stay 0 and are sliced off in wrapper.
    col = jax.lax.broadcasted_iota(jnp.int32, heads.shape, dimension=1)
    is_policy = col < action_dim
    m = jnp.max(jnp.where(is_policy, heads, -jnp.inf), axis=1, keepdims=True)
    e = jnp.where(is_policy, jnp.exp(heads - m), 0.0)           # mask after exp
    denom = jnp.sum(e, axis=1, keepdims=True)
    out_ref[...] = jnp.where(is_policy, e / denom, heads)       # exact normalize


def _round_up(n, m):
    return ((n + m - 1) // m) * m


def prepare_params(params):
    """One-time weight prep: bf16 casts + fused, lane-dense (128-col) head.

    Hoisted out of the per-call hot path so inference only runs the kernel.
    """
    w1, b1, w2, b2, wp, wv, bv = params
    H = w2.shape[0]
    A = wp.shape[1]
    assert A + 1 <= HEAD_PAD

    wh = jnp.concatenate(
        [wp, wv, jnp.zeros((H, HEAD_PAD - A - 1), jnp.float32)], axis=1)
    bh = jnp.concatenate(
        [jnp.zeros((1, A), jnp.float32), bv,
         jnp.zeros((1, HEAD_PAD - A - 1), jnp.float32)], axis=1)

    return dict(
        w1=w1.astype(jnp.bfloat16),
        b1=b1,
        w2=w2.astype(jnp.bfloat16),
        b2=b2,
        wh=wh.astype(jnp.bfloat16),
        bh=bh,
        action_dim=A,
    )


def a2c_forward(x, fused, *, max_block_b=1024):
    """Forward pass.  x: [B, obs_dim] float32, fused: output of prepare_params."""
    B, obs = x.shape
    A = fused["action_dim"]
    H = fused["w2"].shape[0]

    xb = x.astype(jnp.bfloat16)

    # batch tile (multiple of 8 sublanes); one grid step for small B, >=2
    # parallel steps for large B (v7x megacore).
    TB = min(max_block_b, _round_up(B, 8))
    Bp = _round_up(B, TB)
    if Bp != B:
        xb = jnp.pad(xb, ((0, Bp - B), (0, 0)))

    kernel = functools.partial(a2c_forward_kernel, action_dim=A)

    def resident(arr):
        # weights / biases: same block every grid step -> stay resident in VMEM
        return pl.BlockSpec(arr.shape, lambda i: (0, 0))

    # VMEM footprint: double-buffered x tile + out tile, resident weights, slack.
    vmem_bytes = (2 * (TB * obs * 2 + TB * HEAD_PAD * 4)
                  + 2 * (obs * H * 2 + H * H * 2 + H * HEAD_PAD * 2 + 3 * H * 4
                         + HEAD_PAD * 4)
                  + (4 << 20))
    vmem_bytes = min(max(vmem_bytes, 4 << 20), 32 << 20)

    packed = pl.pallas_call(
        kernel,
        out_shape=jax.ShapeDtypeStruct((Bp, HEAD_PAD), jnp.float32),
        grid=(Bp // TB,),
        in_specs=[
            pl.BlockSpec((TB, obs), lambda i: (i, 0)),   # x: batch-tiled
            resident(fused["w1"]),
            resident(fused["b1"]),
            resident(fused["w2"]),
            resident(fused["b2"]),
            resident(fused["wh"]),
            resident(fused["bh"]),
        ],
        out_specs=pl.BlockSpec((TB, HEAD_PAD), lambda i: (i, 0)),
        compiler_params=pltpu.CompilerParams(
            dimension_semantics=("parallel",),
            vmem_limit_bytes=vmem_bytes,
        ),
    )(xb, fused["w1"], fused["b1"], fused["w2"], fused["b2"],
      fused["wh"], fused["bh"])

    probs = packed[:B, :A]
    value = packed[:B, A:A + 1]
    return probs, value


def init_params(key, obs_dim, hidden_dim, action_dim):
    """Deterministic parameter init (shapes match the PyTorch module)."""
    ks = jax.random.split(key, 7)
    scale = 0.1
    # stored as [in, out] (transposed vs. torch's [out, in]) for x @ W
    w1 = scale * jax.random.normal(ks[0], (obs_dim, hidden_dim), jnp.float32)
    b1 = scale * jax.random.normal(ks[1], (1, hidden_dim), jnp.float32)
    w2 = scale * jax.random.normal(ks[2], (hidden_dim, hidden_dim), jnp.float32)
    b2 = scale * jax.random.normal(ks[3], (1, hidden_dim), jnp.float32)
    wp = scale * jax.random.normal(ks[4], (hidden_dim, action_dim), jnp.float32)  # bias-free policy head
    wv = scale * jax.random.normal(ks[5], (hidden_dim, 1), jnp.float32)
    bv = scale * jax.random.normal(ks[6], (1, 1), jnp.float32)
    return (w1, b1, w2, b2, wp, wv, bv)


def reference_forward(x, params):
    """Pure-JAX reference using the same bf16-inputs / f32-accumulation recipe."""
    w1, b1, w2, b2, wp, wv, bv = params

    def d(a, w):
        return jnp.dot(a.astype(jnp.bfloat16), w.astype(jnp.bfloat16),
                       preferred_element_type=jnp.float32)

    h1 = jnp.maximum(d(x, w1) + b1, 0.0)
    feats = jnp.maximum(d(h1, w2) + b2, 0.0)
    logits = d(feats, wp)
    probs = jax.nn.softmax(logits, axis=1)
    value = d(feats, wv) + bv
    return probs, value


if __name__ == "__main__":
    # CartPole-like shapes: obs_dim=4, 2 actions, hidden_dim=64 (module default),
    # batch=64 -> single batch tile / single grid step.
    B, OBS, HID, ACT = 64, 4, 64, 2
    key = jax.random.PRNGKey(0)
    kx, kp = jax.random.split(key)
    x = jax.random.normal(kx, (B, OBS), jnp.float32)
    params = init_params(kp, OBS, HID, ACT)

    fused = prepare_params(params)                      # hoisted one-time prep
    probs, value = a2c_forward(x, fused)
    jax.block_until_ready((probs, value))

    ref_probs, ref_value = reference_forward(x, params)
    assert probs.shape == (B, ACT) and value.shape == (B, 1)
    assert jnp.allclose(probs, ref_probs, atol=2e-3, rtol=2e-3)
    assert jnp.allclose(value, ref_value, atol=2e-3, rtol=2e-3)
    assert jnp.allclose(jnp.sum(probs, axis=1), 1.0, atol=2e-3)

    print("KERNEL_OK")
</pallas_src>

<mosaic_0001>
module attributes {stable_mosaic.version = 11 : i64} {
  func.func @a2c_forward_kernel(%arg0: i32, %arg1: memref<64x4xbf16, #tpu.memory_space<vmem>>, %arg2: memref<4x64xbf16, #tpu.memory_space<vmem>>, %arg3: memref<1x64xf32, #tpu.memory_space<vmem>>, %arg4: memref<64x64xbf16, #tpu.memory_space<vmem>>, %arg5: memref<1x64xf32, #tpu.memory_space<vmem>>, %arg6: memref<64x128xbf16, #tpu.memory_space<vmem>>, %arg7: memref<1x128xf32, #tpu.memory_space<vmem>>, %arg8: memref<64x128xf32, #tpu.memory_space<vmem>>) attributes {dimension_semantics = [#tpu.dimension_semantics<parallel>], iteration_bounds = array<i64: 1>, scalar_prefetch = 0 : i64, scratch_operands = 0 : i64, tpu.core_type = #tpu.core_type<tc>, window_params = [{transform_indices = @transform_0, window_bounds = array<i64: 64, 4>}, {pipeline_mode = #tpu.pipeline_mode<synchronous>, transform_indices = @transform_1, window_bounds = array<i64: 4, 64>}, {pipeline_mode = #tpu.pipeline_mode<synchronous>, transform_indices = @transform_2, window_bounds = array<i64: 1, 64>}, {pipeline_mode = #tpu.pipeline_mode<synchronous>, transform_indices = @transform_3, window_bounds = array<i64: 64, 64>}, {pipeline_mode = #tpu.pipeline_mode<synchronous>, transform_indices = @transform_4, window_bounds = array<i64: 1, 64>}, {pipeline_mode = #tpu.pipeline_mode<synchronous>, transform_indices = @transform_5, window_bounds = array<i64: 64, 128>}, {pipeline_mode = #tpu.pipeline_mode<synchronous>, transform_indices = @transform_6, window_bounds = array<i64: 1, 128>}, {transform_indices = @transform_7, window_bounds = array<i64: 64, 128>}]} {
    %c0 = arith.constant 0 : index
    %c0_0 = arith.constant 0 : index
    %0 = vector.load %arg1[%c0, %c0_0] : memref<64x4xbf16, #tpu.memory_space<vmem>>, vector<64x4xbf16>
    %c0_1 = arith.constant 0 : index
    %c0_2 = arith.constant 0 : index
    %1 = vector.load %arg2[%c0_1, %c0_2] : memref<4x64xbf16, #tpu.memory_space<vmem>>, vector<4x64xbf16>
    %cst = arith.constant dense<0.000000e+00> : vector<64x64xf32>
    %2 = tpu.matmul %0, %1, %cst {dimension_numbers = #tpu.dot_dimension_numbers<[1], [0], [0], [1], [0, 0, 1, 1], [], []>} : vector<64x4xbf16>, vector<4x64xbf16>, vector<64x64xf32> -> vector<64x64xf32>
    %c0_3 = arith.constant 0 : index
    %c0_4 = arith.constant 0 : index
    %3 = vector.load %arg3[%c0_3, %c0_4] : memref<1x64xf32, #tpu.memory_space<vmem>>, vector<1x64xf32>
    %4 = vector.broadcast %3 : vector<1x64xf32> to vector<64x64xf32>
    %5 = arith.addf %2, %4 : vector<64x64xf32>
    %cst_5 = arith.constant 0.000000e+00 : f32
    %6 = vector.broadcast %cst_5 : f32 to vector<64x64xf32>
    %7 = arith.maximumf %5, %6 : vector<64x64xf32>
    %8 = arith.truncf %7 : vector<64x64xf32> to vector<64x64xbf16>
    %c0_6 = arith.constant 0 : index
    %c0_7 = arith.constant 0 : index
    %9 = vector.load %arg4[%c0_6, %c0_7] : memref<64x64xbf16, #tpu.memory_space<vmem>>, vector<64x64xbf16>
    %cst_8 = arith.constant dense<0.000000e+00> : vector<64x64xf32>
    %10 = tpu.matmul %8, %9, %cst_8 {dimension_numbers = #tpu.dot_dimension_numbers<[1], [0], [0], [1], [0, 0, 1, 1], [], []>} : vector<64x64xbf16>, vector<64x64xbf16>, vector<64x64xf32> -> vector<64x64xf32>
    %c0_9 = arith.constant 0 : index
    %c0_10 = arith.constant 0 : index
    %11 = vector.load %arg5[%c0_9, %c0_10] : memref<1x64xf32, #tpu.memory_space<vmem>>, vector<1x64xf32>
    %12 = vector.broadcast %11 : vector<1x64xf32> to vector<64x64xf32>
    %13 = arith.addf %10, %12 : vector<64x64xf32>
    %cst_11 = arith.constant 0.000000e+00 : f32
    %14 = vector.broadcast %cst_11 : f32 to vector<64x64xf32>
    %15 = arith.maximumf %13, %14 : vector<64x64xf32>
    %16 = arith.truncf %15 : vector<64x64xf32> to vector<64x64xbf16>
    %c0_12 = arith.constant 0 : index
    %c0_13 = arith.constant 0 : index
    %17 = vector.load %arg6[%c0_12, %c0_13] : memref<64x128xbf16, #tpu.memory_space<vmem>>, vector<64x128xbf16>
    %cst_14 = arith.constant dense<0.000000e+00> : vector<64x128xf32>
    %18 = tpu.matmul %16, %17, %cst_14 {dimension_numbers = #tpu.dot_dimension_numbers<[1], [0], [0], [1], [0, 0, 1, 1], [], []>} : vector<64x64xbf16>, vector<64x128xbf16>, vector<64x128xf32> -> vector<64x128xf32>
    %c0_15 = arith.constant 0 : index
    %c0_16 = arith.constant 0 : index
    %19 = vector.load %arg7[%c0_15, %c0_16] : memref<1x128xf32, #tpu.memory_space<vmem>>, vector<1x128xf32>
    %20 = vector.broadcast %19 : vector<1x128xf32> to vector<64x128xf32>
    %21 = arith.addf %18, %20 : vector<64x128xf32>
    %22 = tpu.iota {dimensions = array<i32: 1>} : vector<64x128xi32>
    %c2_i32 = arith.constant 2 : i32
    %23 = vector.broadcast %c2_i32 : i32 to vector<64x128xi32>
    %24 = arith.cmpi slt, %22, %23 : vector<64x128xi32>
    %cst_17 = arith.constant 0xFF800000 : f32
    %25 = vector.broadcast %cst_17 : f32 to vector<64x128xf32>
    %26 = arith.select %24, %21, %25 : vector<64x128xi1>, vector<64x128xf32>
    %cst_18 = arith.constant dense<0xFF800000> : vector<64xf32>
    %27 = vector.multi_reduction <maximumf>, %26, %cst_18 [1] : vector<64x128xf32> to vector<64xf32>
    %28 = vector.shape_cast %27 : vector<64xf32> to vector<64x1xf32>
    %29 = vector.broadcast %28 : vector<64x1xf32> to vector<64x128xf32>
    %30 = arith.subf %21, %29 : vector<64x128xf32>
    %31 = math.exp %30 : vector<64x128xf32>
    %cst_19 = arith.constant 0.000000e+00 : f32
    %32 = vector.broadcast %cst_19 : f32 to vector<64x128xf32>
    %33 = arith.select %24, %31, %32 : vector<64x128xi1>, vector<64x128xf32>
    %cst_20 = arith.constant dense<0.000000e+00> : vector<64xf32>
    %34 = vector.multi_reduction <add>, %33, %cst_20 [1] : vector<64x128xf32> to vector<64xf32>
    %35 = vector.shape_cast %34 : vector<64xf32> to vector<64x1xf32>
    %36 = vector.broadcast %35 : vector<64x1xf32> to vector<64x128xf32>
    %37 = arith.divf %33, %36 : vector<64x128xf32>
    %38 = arith.select %24, %37, %21 : vector<64x128xi1>, vector<64x128xf32>
    %c0_21 = arith.constant 0 : index
    %c0_22 = arith.constant 0 : index
    %39 = vector.load %arg8[%c0_21, %c0_22] : memref<64x128xf32, #tpu.memory_space<vmem>>, vector<64x128xf32>
    tpu.vector_store %arg8[%c0_21, %c0_22], %38 {strides = array<i32>} : memref<64x128xf32, #tpu.memory_space<vmem>>, vector<64x128xf32>,
    return
  }
  func.func @transform_0(%arg0: i32) -> (i32, i32) {
    %c0_i32 = arith.constant 0 : i32
    %c0_i32_0 = arith.constant 0 : i32
    return %arg0, %c0_i32 : i32, i32
  }
  func.func @transform_1(%arg0: i32) -> (i32, i32) {
    %c0_i32 = arith.constant 0 : i32
    %c0_i32_0 = arith.constant 0 : i32
    %c0_i32_1 = arith.constant 0 : i32
    return %c0_i32, %c0_i32_0 : i32, i32
  }
  func.func @transform_2(%arg0: i32) -> (i32, i32) {
    %c0_i32 = arith.constant 0 : i32
    %c0_i32_0 = arith.constant 0 : i32
    %c0_i32_1 = arith.constant 0 : i32
    return %c0_i32, %c0_i32_0 : i32, i32
  }
  func.func @transform_3(%arg0: i32) -> (i32, i32) {
    %c0_i32 = arith.constant 0 : i32
    %c0_i32_0 = arith.constant 0 : i32
    %c0_i32_1 = arith.constant 0 : i32
    return %c0_i32, %c0_i32_0 : i32, i32
  }
  func.func @transform_4(%arg0: i32) -> (i32, i32) {
    %c0_i32 = arith.constant 0 : i32
    %c0_i32_0 = arith.constant 0 : i32
    %c0_i32_1 = arith.constant 0 : i32
    return %c0_i32, %c0_i32_0 : i32, i32
  }
  func.func @transform_5(%arg0: i32) -> (i32, i32) {
    %c0_i32 = arith.constant 0 : i32
    %c0_i32_0 = arith.constant 0 : i32
    %c0_i32_1 = arith.constant 0 : i32
    return %c0_i32, %c0_i32_0 : i32, i32
  }
  func.func @transform_6(%arg0: i32) -> (i32, i32) {
    %c0_i32 = arith.constant 0 : i32
    %c0_i32_0 = arith.constant 0 : i32
    %c0_i32_1 = arith.constant 0 : i32
    return %c0_i32, %c0_i32_0 : i32, i32
  }
  func.func @transform_7(%arg0: i32) -> (i32, i32) {
    %c0_i32 = arith.constant 0 : i32
    %c0_i32_0 = arith.constant 0 : i32
    return %arg0, %c0_i32 : i32, i32
  }
}

</mosaic_0001>

<llo_original>
// kernel: tpu_custom_call.1
$region0: #{tpu_custom_call.1}
  #allocation0 [shape = 'u32[]', space=smem, size = 0x4, offset = 0x4, fixed_abs, tag = 'smem constant byte address 0x4 - core index']
  #allocation1 [shape = 'u32[144,128]{1,0:T(1,128)}', space=vmem, size = 0x12000, scoped, tag = 'internal scratch']
  %s0 = inlined_call_operand.vmem [shape: bf16[64,4], index: 0, kind: input, shape index: {}]
  %s1 = inlined_call_operand.vmem [shape: bf16[4,64], index: 1, kind: input, shape index: {}]
  %s2 = inlined_call_operand.vmem [shape: f32[1,64], index: 2, kind: input, shape index: {}]
  %s3 = inlined_call_operand.vmem [shape: bf16[64,64], index: 3, kind: input, shape index: {}]
  %s4 = inlined_call_operand.vmem [shape: f32[1,64], index: 4, kind: input, shape index: {}]
  %s5 = inlined_call_operand.hbm [shape: bf16[64,128], index: 5, kind: input, shape index: {}]
  %s6 = inlined_call_operand.vmem [shape: f32[1,128], index: 6, kind: input, shape index: {}]
  %s7 = inlined_call_operand.hbm [shape: f32[64,128], index: 7, kind: output, shape index: {}]
  %s8 = sld [smem:[#allocation0]]
  $region42: #{tpu_custom_call.1} parent=0
    _
  %s10 = ssub.s32 1, %s8
  %s11 = scalar_select 0, %s10, %s8
  $region1: #{tpu_custom_call.1} parent=0
    #allocation2 [shape = 'u8[16384]{0}', space=vmem, size = 0x4000, scoped, tag = 'input window, operand 5, single buffered']
    #allocation3 [shape = 's32[1]{0}', space=sflag, size = 0x4, scoped, tag = 'scoped memory for tpu_custom_call.1']
    #allocation4 [shape = 's32[1]{0}', space=sflag, size = 0x4, scoped, tag = 'scoped memory for tpu_custom_call.1']
    #allocation5 [shape = 'u8[32768]{0}', space=vmem, size = 0x8000, scoped, tag = 'output window, operand 0, single buffered']
    %12 = vsyncpa [#allocation3], 0
    %13 = vsyncpa [#allocation4], 0
    // Predicated region
    $region2: #{tpu_custom_call.1} parent=1 // pred_check
      _
    $region3: #{tpu_custom_call.1} parent=1 // pred_check_branch
      %15 = sbr.rel (0) target = $region5
    $region4: #{tpu_custom_call.1} parent=1 // pred_region
      _
    $region5: #{tpu_custom_call.1} parent=1 // pred_fallthru
      _
    // Predicated region
    $region6: #{tpu_custom_call.1} parent=1 // pred_check
      _
    $region7: #{tpu_custom_call.1} parent=1 // pred_check_branch
      %17 = sbr.rel (0) target = $region9
    $region8: #{tpu_custom_call.1} parent=1 // pred_region
      _
    $region9: #{tpu_custom_call.1} parent=1 // pred_fallthru
      _
    // Predicated region
    $region10: #{tpu_custom_call.1} parent=1 // pred_check
      _
    $region11: #{tpu_custom_call.1} parent=1 // pred_check_branch
      %19 = sbr.rel (0) target = $region13
    $region12: #{tpu_custom_call.1} parent=1 // pred_region
      _
    $region13: #{tpu_custom_call.1} parent=1 // pred_fallthru
      _
    // Predicated region
    $region14: #{tpu_custom_call.1} parent=1 // pred_check
      _
    $region15: #{tpu_custom_call.1} parent=1 // pred_check_branch
      %21 = sbr.rel (0) target = $region17
    $region16: #{tpu_custom_call.1} parent=1 // pred_region
      _
    $region17: #{tpu_custom_call.1} parent=1 // pred_fallthru
      _
    // Predicated region
    $region18: #{tpu_custom_call.1} parent=1 // pred_check
      _
    $region19: #{tpu_custom_call.1} parent=1 // pred_check_branch
      %23 = sbr.rel (0) target = $region21
    $region20: #{tpu_custom_call.1} parent=1 // pred_region
      _
    $region21: #{tpu_custom_call.1} parent=1 // pred_fallthru
      _
    // Predicated region
    $region22: #{tpu_custom_call.1} parent=1 // pred_check
      _
    $region23: #{tpu_custom_call.1} parent=1 // pred_check_branch
      %25 = sbr.rel (0) target = $region25
    $region24: #{tpu_custom_call.1} parent=1 // pred_region
      %s27 = ssub.s32 512, 512
      %28 = vsyncadd [#allocation3], %s27
      %s29 = sshll.u32 [#allocation2], 4
      %s30 = int_to_ptr.vmem [resolvable:$true] %s29
      %35 = dma.hbm_to_vmem [thread:$0]  %s5, 512, %s30, [#allocation3], 64, 64, 4
    $region25: #{tpu_custom_call.1} parent=1 // pred_fallthru
      _
    // Predicated region
    $region26: #{tpu_custom_call.1} parent=1 // pred_check
      _
    $region27: #{tpu_custom_call.1} parent=1 // pred_check_branch
      %37 = sbr.rel (0) target = $region29
    $region28: #{tpu_custom_call.1} parent=1 // pred_region
      _
    $region29: #{tpu_custom_call.1} parent=1 // pred_fallthru
      _
    // Predicated region
    $region30: #{tpu_custom_call.1} parent=1 // pred_check
      _
    $region31: #{tpu_custom_call.1} parent=1 // pred_check_branch
      %39 = sbr.rel (0) target = $region33
    $region32: #{tpu_custom_call.1} parent=1 // pred_region
      %40 = dma.done [#allocation3], 512
    $region33: #{tpu_custom_call.1} parent=1 // pred_fallthru
      _
    %v42 = vld [vmem:[%s0] sm:$0xf]
    %v43 = vld [vmem:[%s0 + $0x4] sm:$0xf]
    %v44 = vld [vmem:[%s0 + $0x8] sm:$0xf]
    %v45 = vld [vmem:[%s0 + $0xc] sm:$0xf]
    %v46 = vld [vmem:[%s0 + $0x10] sm:$0xf]
    %v47 = vld [vmem:[%s0 + $0x14] sm:$0xf]
    %v48 = vld [vmem:[%s0 + $0x18] sm:$0xf]
    %v49 = vld [vmem:[%s0 + $0x1c] sm:$0xf]
    %v50 = vld [vmem:[%s1] sm:$0x3]
    %v51 = vld [vmem:[%s2] sm:$0x1]
    %v53 = vlaneseq
    %v54 = vshrl.u32 %v53, 7
    %v55 = vsub.s32 0, %v54
    %v56 = vrot.slane %v51, %v55
    %v66 = vunpack.c.l.b16 %v42
    %v67 = vunpack.c.l.b16 %v43
    %v68 = vunpack.c.l.b16 %v44
    %v69 = vunpack.c.l.b16 %v45
    %v70 = vunpack.c.l.b16 %v46
    %v71 = vunpack.c.l.b16 %v47
    %v72 = vunpack.c.l.b16 %v48
    %v73 = vunpack.c.l.b16 %v49
    %v74 = vpack.c.b16 %v67, %v66
    %v75 = vpack.c.b16 %v69, %v68
    %v76 = vpack.c.b16 %v71, %v70
    %v77 = vpack.c.b16 %v73, %v72
    %vm78 = vcmask 31744
    %v80 = vsel %vm78, %v74, 0
    %v83 = vsel %vm78, %v75, 0
    %v86 = vsel %vm78, %v76, 0
    %v89 = vsel %vm78, %v77, 0
    %vm91 = vcmask 1041408
    %v93 = vsel %vm91, %v50, 0
    %95 = vmatprep.subr.bf16.mxu0 0
    %96 = vmatpush1.bf16.msra.mxu0 0
    %97 = vmatprep.subr.bf16.mxu0 0
    %98 = vmatpush1.bf16.msra.mxu0 0
    %99 = vmatprep.subr.bf16.mxu0 0
    %100 = vmatpush1.bf16.msra.mxu0 0
    %101 = vmatprep.subr.bf16.mxu0 0
    %102 = vmatpush1.bf16.msra.mxu0 0
    %103 = vmatprep.subr.bf16.mxu0 0
    %104 = vmatpush1.bf16.msra.mxu0 0
    %105 = vmatprep.subr.bf16.mxu0 0
    %106 = vmatpush1.bf16.msra.mxu0 0
    %107 = vmatprep.subr.bf16.mxu0 0
    %108 = vmatpush1.bf16.msra.mxu0 0
    %109 = vmatprep.subr.bf16.mxu0 0
    %110 = vmatpush1.bf16.msra.mxu0 %v93
    %111 = vmatprep.subr.bf16.mxu0 0
    %112 = vmatpush2.bf16.msra.mxu0 0
    %113 = vmatprep.subr.bf16.mxu0 0
    %114 = vmatpush2.bf16.msra.mxu0 0
    %115 = vmatprep.subr.bf16.mxu0 0
    %116 = vmatpush2.bf16.msra.mxu0 0
    %117 = vmatprep.subr.bf16.mxu0 0
    %118 = vmatpush2.bf16.msra.mxu0 0
    %119 = vmatprep.subr.bf16.mxu0 0
    %120 = vmatpush2.bf16.msra.mxu0 0
    %121 = vmatprep.subr.bf16.mxu0 0
    %122 = vmatpush2.bf16.msra.mxu0 0
    %123 = vmatprep.subr.bf16.mxu0 0
    %124 = vmatpush2.bf16.msra.mxu0 0
    %125 = vmatprep.subr.bf16.mxu0 0
    %126 = vmatpush2.bf16.msra.mxu0 0
    %127 = vmatprep.mubr.bf16.mxu0 0
    %128 = vmatmul.mubr.bf16.gmra.mxu0 %v80
    %v129 = vpop.f32.mrf.mxu0
    %v130 = vadd.f32 %v56, %v129
    %v131 = vpop.f32.mrf.mxu0
    %v132 = vpop.f32.mrf.mxu0
    %v133 = vadd.f32 %v56, %v132
    %v134 = vpop.f32.mrf.mxu0
    %135 = vmatprep.mubr.bf16.mxu0 0
    %136 = vmatmul.mubr.bf16.gmra.mxu0 %v83
    %v137 = vpop.f32.mrf.mxu0
    %v138 = vadd.f32 %v56, %v137
    %v139 = vpop.f32.mrf.mxu0
    %v140 = vpop.f32.mrf.mxu0
    %v141 = vadd.f32 %v56, %v140
    %v142 = vpop.f32.mrf.mxu0
    %143 = vmatprep.mubr.bf16.mxu0 0
    %144 = vmatmul.mubr.bf16.gmra.mxu0 %v86
    %v145 = vpop.f32.mrf.mxu0
    %v146 = vadd.f32 %v56, %v145
    %v147 = vpop.f32.mrf.mxu0
    %v148 = vpop.f32.mrf.mxu0
    %v149 = vadd.f32 %v56, %v148
    %v150 = vpop.f32.mrf.mxu0
    %151 = vmatprep.mubr.bf16.mxu0 0
    %152 = vmatmul.mubr.bf16.gmra.mxu0 %v89
    %v153 = vpop.f32.mrf.mxu0
    %v154 = vadd.f32 %v56, %v153
    %v155 = vpop.f32.mrf.mxu0
    %v156 = vpop.f32.mrf.mxu0
    %v157 = vadd.f32 %v56, %v156
    %v158 = vpop.f32.mrf.mxu0
    %159 = vdwg.mxu0
    %v160 = vmax.f32 %v130, 0.0
    %v161 = vmax.f32 %v133, 0.0
    %v162 = vmax.f32 %v138, 0.0
    %v163 = vmax.f32 %v141, 0.0
    %v164 = vmax.f32 %v146, 0.0
    %v165 = vmax.f32 %v149, 0.0
    %v166 = vmax.f32 %v154, 0.0
    %v167 = vmax.f32 %v157, 0.0
    %v168 = vpack.c.bf16 %v161, %v160
    %v169 = vpack.c.bf16 %v163, %v162
    %v170 = vpack.c.bf16 %v165, %v164
    %v171 = vpack.c.bf16 %v167, %v166
    %v172 = vld [vmem:[%s3] sm:$0xf]
    %v173 = vld [vmem:[%s3 + $0x4] sm:$0xf]
    %v174 = vld [vmem:[%s3 + $0x8] sm:$0xf]
    %v175 = vld [vmem:[%s3 + $0xc] sm:$0xf]
    %v176 = vld [vmem:[%s3 + $0x10] sm:$0xf]
    %v177 = vld [vmem:[%s3 + $0x14] sm:$0xf]
    %v178 = vld [vmem:[%s3 + $0x18] sm:$0xf]
    %v179 = vld [vmem:[%s3 + $0x1c] sm:$0xf]
    %v180 = vld [vmem:[%s4] sm:$0x1]
    %v182 = vlaneseq
    %v183 = vshrl.u32 %v182, 7
    %v184 = vsub.s32 0, %v183
    %v185 = vrot.slane %v180, %v184
    %v195 = vunpack.c.l.b16 %v172
    %v196 = vunpack.c.l.b16 %v173
    %v197 = vunpack.c.l.b16 %v174
    %v198 = vunpack.c.l.b16 %v175
    %v199 = vunpack.c.l.b16 %v176
    %v200 = vunpack.c.l.b16 %v177
    %v201 = vunpack.c.l.b16 %v178
    %v202 = vunpack.c.l.b16 %v179
    %v203 = vpack.c.b16 %v196, %v195
    %v204 = vpack.c.b16 %v198, %v197
    %v205 = vpack.c.b16 %v200, %v199
    %v206 = vpack.c.b16 %v202, %v201
    %vm211 = vcmask 523264
    %v213 = vsel %vm211, %v168, 0
    %v216 = vsel %vm211, %v169, 0
    %v219 = vsel %vm211, %v170, 0
    %v222 = vsel %vm211, %v171, 0
    %224 = vmatprep.subr.bf16.mxu0 0
    %225 = vmatpush1.bf16.msra.mxu0 0
    %226 = vmatprep.subr.bf16.mxu0 0
    %227 = vmatpush1.bf16.msra.mxu0 0
    %228 = vmatprep.subr.bf16.mxu0 0
    %229 = vmatpush1.bf16.msra.mxu0 0
    %230 = vmatprep.subr.bf16.mxu0 0
    %231 = vmatpush1.bf16.msra.mxu0 0
    %232 = vmatprep.subr.bf16.mxu0 0
    %233 = vmatpush1.bf16.msra.mxu0 %v206
    %234 = vmatprep.subr.bf16.mxu0 0
    %235 = vmatpush1.bf16.msra.mxu0 %v205
    %236 = vmatprep.subr.bf16.mxu0 0
    %237 = vmatpush1.bf16.msra.mxu0 %v204
    %238 = vmatprep.subr.bf16.mxu0 0
    %239 = vmatpush1.bf16.msra.mxu0 %v203
    %240 = vmatprep.subr.bf16.mxu0 0
    %241 = vmatpush2.bf16.msra.mxu0 0
    %242 = vmatprep.subr.bf16.mxu0 0
    %243 = vmatpush2.bf16.msra.mxu0 0
    %244 = vmatprep.subr.bf16.mxu0 0
    %245 = vmatpush2.bf16.msra.mxu0 0
    %246 = vmatprep.subr.bf16.mxu0 0
    %247 = vmatpush2.bf16.msra.mxu0 0
    %248 = vmatprep.subr.bf16.mxu0 0
    %249 = vmatpush2.bf16.msra.mxu0 0
    %250 = vmatprep.subr.bf16.mxu0 0
    %251 = vmatpush2.bf16.msra.mxu0 0
    %252 = vmatprep.subr.bf16.mxu0 0
    %253 = vmatpush2.bf16.msra.mxu0 0
    %254 = vmatprep.subr.bf16.mxu0 0
    %255 = vmatpush2.bf16.msra.mxu0 0
    %256 = vmatprep.mubr.bf16.mxu0 0
    %257 = vmatmul.mubr.bf16.gmra.mxu0 %v213
    %v258 = vpop.f32.mrf.mxu0
    %v259 = vadd.f32 %v185, %v258
    %v260 = vpop.f32.mrf.mxu0
    %v261 = vpop.f32.mrf.mxu0
    %v262 = vadd.f32 %v185, %v261
    %v263 = vpop.f32.mrf.mxu0
    %264 = vmatprep.mubr.bf16.mxu0 0
    %265 = vmatmul.mubr.bf16.gmra.mxu0 %v216
    %v266 = vpop.f32.mrf.mxu0
    %v267 = vadd.f32 %v185, %v266
    %v268 = vpop.f32.mrf.mxu0
    %v269 = vpop.f32.mrf.mxu0
    %v270 = vadd.f32 %v185, %v269
    %v271 = vpop.f32.mrf.mxu0
    %272 = vmatprep.mubr.bf16.mxu0 0
    %273 = vmatmul.mubr.bf16.gmra.mxu0 %v219
    %v274 = vpop.f32.mrf.mxu0
    %v275 = vadd.f32 %v185, %v274
    %v276 = vpop.f32.mrf.mxu0
    %v277 = vpop.f32.mrf.mxu0
    %v278 = vadd.f32 %v185, %v277
    %v279 = vpop.f32.mrf.mxu0
    %280 = vmatprep.mubr.bf16.mxu0 0
    %281 = vmatmul.mubr.bf16.gmra.mxu0 %v222
    %v282 = vpop.f32.mrf.mxu0
    %v283 = vadd.f32 %v185, %v282
    %v284 = vpop.f32.mrf.mxu0
    %v285 = vpop.f32.mrf.mxu0
    %v286 = vadd.f32 %v185, %v285
    %v287 = vpop.f32.mrf.mxu0
    %288 = vdwg.mxu0
    %v289 = vmax.f32 %v259, 0.0
    %v290 = vmax.f32 %v262, 0.0
    %v291 = vmax.f32 %v267, 0.0
    %v292 = vmax.f32 %v270, 0.0
    %v293 = vmax.f32 %v275, 0.0
    %v294 = vmax.f32 %v278, 0.0
    %v295 = vmax.f32 %v283, 0.0
    %v296 = vmax.f32 %v286, 0.0
    %v297 = vpack.c.bf16 %v290, %v289
    %v298 = vpack.c.bf16 %v292, %v291
    %v299 = vpack.c.bf16 %v294, %v293
    %v300 = vpack.c.bf16 %v296, %v295
    %v301 = vld [vmem:[#allocation2] sm:$0xf]
    %v302 = vld [vmem:[#allocation2 + $0x4] sm:$0xf]
    %v303 = vld [vmem:[#allocation2 + $0x8] sm:$0xf]
    %v304 = vld [vmem:[#allocation2 + $0xc] sm:$0xf]
    %v305 = vld [vmem:[#allocation2 + $0x10] sm:$0xf]
    %v306 = vld [vmem:[#allocation2 + $0x14] sm:$0xf]
    %v307 = vld [vmem:[#allocation2 + $0x18] sm:$0xf]
    %v308 = vld [vmem:[#allocation2 + $0x1c] sm:$0xf]
    %v309 = vld [vmem:[%s6] sm:$0x1]
    %v311 = vlaneseq
    %v312 = vshrl.u32 %v311, 7
    %v313 = vsub.s32 0, %v312
    %v314 = vrot.slane %v309, %v313
    %v324 = vunpack.c.l.b16 %v301
    %v325 = vunpack.c.l.b16 %v302
    %v326 = vunpack.c.l.b16 %v303
    %v327 = vunpack.c.l.b16 %v304
    %v328 = vunpack.c.l.b16 %v305
    %v329 = vunpack.c.l.b16 %v306
    %v330 = vunpack.c.l.b16 %v307
    %v331 = vunpack.c.l.b16 %v308
    %v332 = vpack.c.b16 %v325, %v324
    %v333 = vpack.c.b16 %v327, %v326
    %v334 = vpack.c.b16 %v329, %v328
    %v335 = vpack.c.b16 %v331, %v330
    %v341 = vsel %vm211, %v297, 0
    %v344 = vsel %vm211, %v298, 0
    %v347 = vsel %vm211, %v299, 0
    %v350 = vsel %vm211, %v300, 0
    %352 = vmatprep.subr.bf16.mxu0 0
    %353 = vmatpush1.bf16.msra.mxu0 0
    %354 = vmatprep.subr.bf16.mxu0 0
    %355 = vmatpush1.bf16.msra.mxu0 0
    %356 = vmatprep.subr.bf16.mxu0 0
    %357 = vmatpush1.bf16.msra.mxu0 0
    %358 = vmatprep.subr.bf16.mxu0 0
    %359 = vmatpush1.bf16.msra.mxu0 0
    %360 = vmatprep.subr.bf16.mxu0 0
    %361 = vmatpush1.bf16.msra.mxu0 %v335
    %362 = vmatprep.subr.bf16.mxu0 0
    %363 = vmatpush1.bf16.msra.mxu0 %v334
    %364 = vmatprep.subr.bf16.mxu0 0
    %365 = vmatpush1.bf16.msra.mxu0 %v333
    %366 = vmatprep.subr.bf16.mxu0 0
    %367 = vmatpush1.bf16.msra.mxu0 %v332
    %368 = vmatprep.subr.bf16.mxu0 0
    %369 = vmatpush2.bf16.msra.mxu0 0
    %370 = vmatprep.subr.bf16.mxu0 0
    %371 = vmatpush2.bf16.msra.mxu0 0
    %372 = vmatprep.subr.bf16.mxu0 0
    %373 = vmatpush2.bf16.msra.mxu0 0
    %374 = vmatprep.subr.bf16.mxu0 0
    %375 = vmatpush2.bf16.msra.mxu0 0
    %376 = vmatprep.subr.bf16.mxu0 0
    %377 = vmatpush2.bf16.msra.mxu0 0
    %378 = vmatprep.subr.bf16.mxu0 0
    %379 = vmatpush2.bf16.msra.mxu0 0
    %380 = vmatprep.subr.bf16.mxu0 0
    %381 = vmatpush2.bf16.msra.mxu0 0
    %382 = vmatprep.subr.bf16.mxu0 0
    %383 = vmatpush2.bf16.msra.mxu0 0
    %384 = vmatprep.mubr.bf16.mxu0 0
    %385 = vmatmul.mubr.bf16.gmra.mxu0 %v341
    %v386 = vpop.f32.mrf.mxu0
    %v387 = vadd.f32 %v314, %v386
    %v388 = vpop.f32.mrf.mxu0
    %v389 = vpop.f32.mrf.mxu0
    %v390 = vadd.f32 %v314, %v389
    %v391 = vpop.f32.mrf.mxu0
    %392 = vmatprep.mubr.bf16.mxu0 0
    %393 = vmatmul.mubr.bf16.gmra.mxu0 %v344
    %v394 = vpop.f32.mrf.mxu0
    %v395 = vadd.f32 %v314, %v394
    %v396 = vpop.f32.mrf.mxu0
    %v397 = vpop.f32.mrf.mxu0
    %v398 = vadd.f32 %v314, %v397
    %v399 = vpop.f32.mrf.mxu0
    %400 = vmatprep.mubr.bf16.mxu0 0
    %401 = vmatmul.mubr.bf16.gmra.mxu0 %v347
    %v402 = vpop.f32.mrf.mxu0
    %v403 = vadd.f32 %v314, %v402
    %v404 = vpop.f32.mrf.mxu0
    %v405 = vpop.f32.mrf.mxu0
    %v406 = vadd.f32 %v314, %v405
    %v407 = vpop.f32.mrf.mxu0
    %408 = vmatprep.mubr.bf16.mxu0 0
    %409 = vmatmul.mubr.bf16.gmra.mxu0 %v350
    %v410 = vpop.f32.mrf.mxu0
    %v411 = vadd.f32 %v314, %v410
    %v412 = vpop.f32.mrf.mxu0
    %v413 = vpop.f32.mrf.mxu0
    %v414 = vadd.f32 %v314, %v413
    %v415 = vpop.f32.mrf.mxu0
    %416 = vdwg.mxu0
    %v417 = vlaneseq
    %v418 = vand.u32 %v417, 127
    %vm419 = vcmp.lt.s32.totalorder %v418, 2
    %v420 = vsel %vm419, %v387, -inf
    %v421 = vsel %vm419, %v390, -inf
    %v422 = vsel %vm419, %v395, -inf
    %v423 = vsel %vm419, %v398, -inf
    %v424 = vsel %vm419, %v403, -inf
    %v425 = vsel %vm419, %v406, -inf
    %v426 = vsel %vm419, %v411, -inf
    %v427 = vsel %vm419, %v414, -inf
    %428 = vmax.xlane.f32.xlu0 %v420
    %v429 = vpop.xlane.xlu0 %428
    %430 = vmax.xlane.f32.xlu0 %v421
    %v431 = vpop.xlane.xlu0 %430
    %432 = vmax.xlane.f32.xlu0 %v422
    %v433 = vpop.xlane.xlu0 %432
    %434 = vmax.xlane.f32.xlu0 %v423
    %v435 = vpop.xlane.xlu0 %434
    %436 = vmax.xlane.f32.xlu0 %v424
    %v437 = vpop.xlane.xlu0 %436
    %438 = vmax.xlane.f32.xlu0 %v425
    %v439 = vpop.xlane.xlu0 %438
    %440 = vmax.xlane.f32.xlu0 %v426
    %v441 = vpop.xlane.xlu0 %440
    %442 = vmax.xlane.f32.xlu0 %v427
    %v443 = vpop.xlane.xlu0 %442
    %v444 = vsub.f32 %v387, %v429
    %v445 = vsub.f32 %v390, %v431
    %v446 = vsub.f32 %v395, %v433
    %v447 = vsub.f32 %v398, %v435
    %v448 = vsub.f32 %v403, %v437
    %v449 = vsub.f32 %v406, %v439
    %v450 = vsub.f32 %v411, %v441
    %v451 = vsub.f32 %v414, %v443
    %v452 = vmul.f32 %v444, 1.442695
    %v453 = vpow.pop %v452
    %v454 = vmul.f32 %v445, 1.442695
    %v455 = vpow.pop %v454
    %v456 = vmul.f32 %v446, 1.442695
    %v457 = vpow.pop %v456
    %v458 = vmul.f32 %v447, 1.442695
    %v459 = vpow.pop %v458
    %v460 = vmul.f32 %v448, 1.442695
    %v461 = vpow.pop %v460
    %v462 = vmul.f32 %v449, 1.442695
    %v463 = vpow.pop %v462
    %v464 = vmul.f32 %v450, 1.442695
    %v465 = vpow.pop %v464
    %v466 = vmul.f32 %v451, 1.442695
    %v467 = vpow.pop %v466
    %v468 = vsel %vm419, %v453, 0.0
    %v469 = vsel %vm419, %v455, 0.0
    %v470 = vsel %vm419, %v457, 0.0
    %v471 = vsel %vm419, %v459, 0.0
    %v472 = vsel %vm419, %v461, 0.0
    %v473 = vsel %vm419, %v463, 0.0
    %v474 = vsel %vm419, %v465, 0.0
    %v475 = vsel %vm419, %v467, 0.0
    %476 = vadd.xlane.f32.xlu0 %v468
    %v477 = vpop.xlane.xlu0 %476
    %478 = vadd.xlane.f32.xlu0 %v469
    %v479 = vpop.xlane.xlu0 %478
    %480 = vadd.xlane.f32.xlu0 %v470
    %v481 = vpop.xlane.xlu0 %480
    %482 = vadd.xlane.f32.xlu0 %v471
    %v483 = vpop.xlane.xlu0 %482
    %484 = vadd.xlane.f32.xlu0 %v472
    %v485 = vpop.xlane.xlu0 %484
    %486 = vadd.xlane.f32.xlu0 %v473
    %v487 = vpop.xlane.xlu0 %486
    %488 = vadd.xlane.f32.xlu0 %v474
    %v489 = vpop.xlane.xlu0 %488
    %490 = vadd.xlane.f32.xlu0 %v475
    %v491 = vpop.xlane.xlu0 %490
    %v492 = vrcp.pop %v477
    %v493 = vmul.f32 %v468, %v492
    %v494 = vrcp.pop %v479
    %v495 = vmul.f32 %v469, %v494
    %v496 = vrcp.pop %v481
    %v497 = vmul.f32 %v470, %v496
    %v498 = vrcp.pop %v483
    %v499 = vmul.f32 %v471, %v498
    %v500 = vrcp.pop %v485
    %v501 = vmul.f32 %v472, %v500
    %v502 = vrcp.pop %v487
    %v503 = vmul.f32 %v473, %v502
    %v504 = vrcp.pop %v489
    %v505 = vmul.f32 %v474, %v504
    %v506 = vrcp.pop %v491
    %v507 = vmul.f32 %v475, %v506
    %v508 = vsel %vm419, %v493, %v387
    %v509 = vsel %vm419, %v495, %v390
    %v510 = vsel %vm419, %v497, %v395
    %v511 = vsel %vm419, %v499, %v398
    %v512 = vsel %vm419, %v501, %v403
    %v513 = vsel %vm419, %v503, %v406
    %v514 = vsel %vm419, %v505, %v411
    %v515 = vsel %vm419, %v507, %v414
    %516 = vst [vmem:[#allocation5] sm:$0xff] %v508
    %517 = vst [vmem:[#allocation5 + $0x8] sm:$0xff] %v509
    %518 = vst [vmem:[#allocation5 + $0x10] sm:$0xff] %v510
    %519 = vst [vmem:[#allocation5 + $0x18] sm:$0xff] %v511
    %520 = vst [vmem:[#allocation5 + $0x20] sm:$0xff] %v512
    %521 = vst [vmem:[#allocation5 + $0x28] sm:$0xff] %v513
    %522 = vst [vmem:[#allocation5 + $0x30] sm:$0xff] %v514
    %523 = vst [vmem:[#allocation5 + $0x38] sm:$0xff] %v515
    // Predicated region
    $region34: #{tpu_custom_call.1} parent=1 // pred_check
      _
    $region35: #{tpu_custom_call.1} parent=1 // pred_check_branch
      %525 = sbr.rel (0) target = $region37
    $region36: #{tpu_custom_call.1} parent=1 // pred_region
      %s527 = ssub.s32 1024, 1024
      %528 = vsyncadd [#allocation4], %s527
      %s529 = sshll.u32 [#allocation5], 4
      %s530 = int_to_ptr.vmem [resolvable:$true] %s529
      %535 = dma.vmem_to_hbm [thread:$0]  %s530, 1024, %s7, [#allocation4], 128, 128, 8
    $region37: #{tpu_custom_call.1} parent=1 // pred_fallthru
      _
    // Predicated region
    $region38: #{tpu_custom_call.1} parent=1 // pred_check
      _
    $region39: #{tpu_custom_call.1} parent=1 // pred_check_branch
      %537 = sbr.rel (0) target = $region41
    $region40: #{tpu_custom_call.1} parent=1 // pred_region
      %538 = dma.done [#allocation4], 1024
    $region41: #{tpu_custom_call.1} parent=1 // pred_fallthru
      _
    %539 = vsyncpa [#allocation3], 1
    %540 = vsyncpa [#allocation4], 1

</llo_original>
